<compile_context>
chip_gen: v7x
topology: tpu7x:2x2x1
jax: 0.10.0
libtpu: 0.0.40
codegen_flags: <defaults>
</compile_context>

<pallas_src>
import jax
import jax.numpy as jnp
from jax.experimental import pallas as pl
from jax.experimental.pallas import tpu as pltpu

BN_EPS = 1e-5
LANE = 128


def _round_up(x, m):
    return (x + m - 1) // m * m


def _mlp_kernel(x_ref, w_ref, p_ref, o_ref):
    # MXU matmul: bf16 operands, f32 accumulation.
    y = jnp.dot(x_ref[...], w_ref[...], preferred_element_type=jnp.float32)

    # Training-mode BatchNorm1d: biased batch statistics over the full batch
    # (the whole batch is resident in this tile; only d_out is tiled).
    # The Linear bias is algebraically cancelled by the mean subtraction, so
    # it is intentionally not added here.
    mean = jnp.mean(y, axis=0, keepdims=True)
    centered = y - mean
    var = jnp.mean(centered * centered, axis=0, keepdims=True)

    gamma = p_ref[0:1, :]
    beta = p_ref[1:2, :]
    scale = gamma * jax.lax.rsqrt(var + BN_EPS)      # rsqrt -> EUP slot (free)
    shift = beta - mean * scale

    # Per-element epilogue: one mul + one add + one max, written straight to
    # the lane-dense output tile (no intermediate VMEM round-trip).
    o_ref[...] = jnp.maximum(y * scale + shift, 0.0).astype(o_ref.dtype)


def mlp_forward(x, w, b, gamma, beta, *, tile_n_out=256):
    """x: [N, d_in] f32; w: [d_in, d_out]; b/gamma/beta: [1, d_out] (or [d_out]).

    Returns relu(batchnorm(x @ w + b)) with training-mode (biased) batch stats.
    """
    n, d_in = x.shape
    d_out = w.shape[1]
    del b  # Linear bias cancels exactly under training-mode BatchNorm.

    d_in_p = _round_up(d_in, LANE)
    d_out_p = _round_up(d_out, LANE)
    # Largest 128-multiple tile (<= tile_n_out) that divides the padded d_out.
    tn = tile_n_out if (d_out_p % tile_n_out == 0) else LANE

    # bf16 matmul operands (pad with zeros; zero rows/cols do not affect y).
    x_p = jnp.zeros((n, d_in_p), jnp.bfloat16).at[:, :d_in].set(
        x.astype(jnp.bfloat16))
    w_p = jnp.zeros((d_in_p, d_out_p), jnp.bfloat16).at[:d_in, :d_out].set(
        w.astype(jnp.bfloat16))

    # Pack BN affine params into one (2, d_out_p) array -> one DMA per step.
    params = jnp.zeros((2, d_out_p), jnp.float32)
    params = params.at[0, :d_out].set(gamma.reshape(-1).astype(jnp.float32))
    params = params.at[1, :d_out].set(beta.reshape(-1).astype(jnp.float32))

    grid = (d_out_p // tn,)

    cost = pl.CostEstimate(
        flops=2 * n * d_in_p * d_out_p,
        transcendentals=d_out_p,
        bytes_accessed=(2 * n * d_in_p            # x (bf16)
                        + 2 * d_in_p * d_out_p    # W (bf16)
                        + 4 * 2 * d_out_p         # gamma/beta (f32)
                        + 4 * n * d_out_p),       # out (f32)
    )

    # TODO(synk): if N ever grows beyond what fits in VMEM (watch v7x's 64 MiB),
    # tile N with a two-phase grid that accumulates per-feature sum / sum-of-sq
    # across N tiles before normalizing (per-tile stats would be wrong).
    out_p = pl.pallas_call(
        _mlp_kernel,
        out_shape=jax.ShapeDtypeStruct((n, d_out_p), jnp.float32),
        grid_spec=pltpu.PrefetchScalarGridSpec(
            num_scalar_prefetch=0,
            grid=grid,
            in_specs=[
                pl.BlockSpec((n, d_in_p), lambda j: (0, 0)),   # x: reused
                pl.BlockSpec((d_in_p, tn), lambda j: (0, j)),  # W tile
                pl.BlockSpec((2, tn), lambda j: (0, j)),       # gamma/beta tile
            ],
            out_specs=pl.BlockSpec((n, tn), lambda j: (0, j)),
        ),
        compiler_params=pltpu.CompilerParams(
            # Feature tiles are independent -> parallel (uses both TCs on v7x).
            dimension_semantics=("parallel",),
        ),
        cost_estimate=cost,
    )(x_p, w_p, params)

    return out_p[:, :d_out]


def mlp_reference(x, w, b, gamma, beta):
    y = x @ w + b
    mean = jnp.mean(y, axis=0, keepdims=True)
    var = jnp.mean((y - mean) ** 2, axis=0, keepdims=True)
    z = gamma * (y - mean) / jnp.sqrt(var + BN_EPS) + beta
    return jnp.maximum(z, 0.0)


if __name__ == "__main__":
    # Small shapes consistent with the module: batch=8, d_in=32, d_out=64.
    N, D_IN, D_OUT = 8, 32, 64

    key = jax.random.PRNGKey(0)
    kx, kw, kb = jax.random.split(key, 3)

    x = jax.random.normal(kx, (N, D_IN), dtype=jnp.float32)

    # Deterministic init mimicking nn.Linear: U(-1/sqrt(d_in), 1/sqrt(d_in)).
    bound = 1.0 / (D_IN ** 0.5)
    w = jax.random.uniform(kw, (D_IN, D_OUT), minval=-bound, maxval=bound,
                           dtype=jnp.float32)
    b = jax.random.uniform(kb, (1, D_OUT), minval=-bound, maxval=bound,
                           dtype=jnp.float32)
    # BatchNorm1d affine params at init: gamma=1, beta=0.
    gamma = jnp.ones((1, D_OUT), dtype=jnp.float32)
    beta = jnp.zeros((1, D_OUT), dtype=jnp.float32)

    out = jax.jit(mlp_forward)(x, w, b, gamma, beta)
    out = jax.block_until_ready(out)

    # Reference uses the same bf16-rounded matmul operands (f32 accumulation),
    # matching the MXU numerics; remaining difference is accumulation order.
    x_q = x.astype(jnp.bfloat16).astype(jnp.float32)
    w_q = w.astype(jnp.bfloat16).astype(jnp.float32)
    ref = mlp_reference(x_q, w_q, b, gamma, beta)

    assert out.shape == (N, D_OUT)
    assert jnp.allclose(out, ref, atol=2e-3, rtol=2e-3), (
        float(jnp.max(jnp.abs(out - ref))))

    print("KERNEL_OK")
</pallas_src>

<mosaic_0001>
module attributes {stable_mosaic.version = 11 : i64} {
  func.func @_mlp_kernel(%arg0: i32, %arg1: memref<8x128xbf16, #tpu.memory_space<vmem>>, %arg2: memref<128x128xbf16, #tpu.memory_space<vmem>>, %arg3: memref<2x128xf32, #tpu.memory_space<vmem>>, %arg4: memref<8x128xf32, #tpu.memory_space<vmem>>) attributes {dimension_semantics = [#tpu.dimension_semantics<parallel>], iteration_bounds = array<i64: 1>, scalar_prefetch = 0 : i64, scratch_operands = 0 : i64, tpu.core_type = #tpu.core_type<tc>, window_params = [{pipeline_mode = #tpu.pipeline_mode<synchronous>, transform_indices = @transform_0, window_bounds = array<i64: 8, 128>}, {transform_indices = @transform_1, window_bounds = array<i64: 128, 128>}, {transform_indices = @transform_2, window_bounds = array<i64: 2, 128>}, {transform_indices = @transform_3, window_bounds = array<i64: 8, 128>}]} {
    %c0 = arith.constant 0 : index
    %c0_0 = arith.constant 0 : index
    %0 = vector.load %arg1[%c0, %c0_0] : memref<8x128xbf16, #tpu.memory_space<vmem>>, vector<8x128xbf16>
    %c0_1 = arith.constant 0 : index
    %c0_2 = arith.constant 0 : index
    %1 = vector.load %arg2[%c0_1, %c0_2] : memref<128x128xbf16, #tpu.memory_space<vmem>>, vector<128x128xbf16>
    %cst = arith.constant dense<0.000000e+00> : vector<8x128xf32>
    %2 = tpu.matmul %0, %1, %cst {dimension_numbers = #tpu.dot_dimension_numbers<[1], [0], [0], [1], [0, 0, 1, 1], [], []>} : vector<8x128xbf16>, vector<128x128xbf16>, vector<8x128xf32> -> vector<8x128xf32>
    %cst_3 = arith.constant dense<0.000000e+00> : vector<128xf32>
    %3 = vector.multi_reduction <add>, %2, %cst_3 [0] : vector<8x128xf32> to vector<128xf32>
    %4 = vector.shape_cast %3 : vector<128xf32> to vector<1x128xf32>
    %cst_4 = arith.constant 8.000000e+00 : f32
    %5 = vector.broadcast %cst_4 : f32 to vector<1x128xf32>
    %6 = arith.divf %4, %5 : vector<1x128xf32>
    %7 = vector.broadcast %6 : vector<1x128xf32> to vector<8x128xf32>
    %8 = arith.subf %2, %7 : vector<8x128xf32>
    %9 = arith.mulf %8, %8 : vector<8x128xf32>
    %cst_5 = arith.constant dense<0.000000e+00> : vector<128xf32>
    %10 = vector.multi_reduction <add>, %9, %cst_5 [0] : vector<8x128xf32> to vector<128xf32>
    %11 = vector.shape_cast %10 : vector<128xf32> to vector<1x128xf32>
    %cst_6 = arith.constant 8.000000e+00 : f32
    %12 = vector.broadcast %cst_6 : f32 to vector<1x128xf32>
    %13 = arith.divf %11, %12 : vector<1x128xf32>
    %c0_7 = arith.constant 0 : index
    %c0_8 = arith.constant 0 : index
    %14 = vector.load %arg3[%c0_7, %c0_8] : memref<2x128xf32, #tpu.memory_space<vmem>>, vector<1x128xf32>
    %c1 = arith.constant 1 : index
    %c0_9 = arith.constant 0 : index
    %15 = vector.load %arg3[%c1, %c0_9] : memref<2x128xf32, #tpu.memory_space<vmem>>, vector<1x128xf32>
    %cst_10 = arith.constant 9.99999974E-6 : f32
    %16 = vector.broadcast %cst_10 : f32 to vector<1x128xf32>
    %17 = arith.addf %13, %16 : vector<1x128xf32>
    %18 = math.rsqrt %17 : vector<1x128xf32>
    %19 = arith.mulf %14, %18 : vector<1x128xf32>
    %20 = arith.mulf %6, %19 : vector<1x128xf32>
    %21 = arith.subf %15, %20 : vector<1x128xf32>
    %22 = vector.broadcast %19 : vector<1x128xf32> to vector<8x128xf32>
    %23 = arith.mulf %2, %22 : vector<8x128xf32>
    %24 = vector.broadcast %21 : vector<1x128xf32> to vector<8x128xf32>
    %25 = arith.addf %23, %24 : vector<8x128xf32>
    %cst_11 = arith.constant 0.000000e+00 : f32
    %26 = vector.broadcast %cst_11 : f32 to vector<8x128xf32>
    %27 = arith.maximumf %25, %26 : vector<8x128xf32>
    %c0_12 = arith.constant 0 : index
    %c0_13 = arith.constant 0 : index
    %28 = vector.load %arg4[%c0_12, %c0_13] : memref<8x128xf32, #tpu.memory_space<vmem>>, vector<8x128xf32>
    tpu.vector_store %arg4[%c0_12, %c0_13], %27 {strides = array<i32>} : memref<8x128xf32, #tpu.memory_space<vmem>>, vector<8x128xf32>,
    return
  }
  func.func @transform_0(%arg0: i32) -> (i32, i32) {
    %c0_i32 = arith.constant 0 : i32
    %c0_i32_0 = arith.constant 0 : i32
    %c0_i32_1 = arith.constant 0 : i32
    return %c0_i32, %c0_i32_0 : i32, i32
  }
  func.func @transform_1(%arg0: i32) -> (i32, i32) {
    %c0_i32 = arith.constant 0 : i32
    %c0_i32_0 = arith.constant 0 : i32
    return %c0_i32, %arg0 : i32, i32
  }
  func.func @transform_2(%arg0: i32) -> (i32, i32) {
    %c0_i32 = arith.constant 0 : i32
    %c0_i32_0 = arith.constant 0 : i32
    return %c0_i32, %arg0 : i32, i32
  }
  func.func @transform_3(%arg0: i32) -> (i32, i32) {
    %c0_i32 = arith.constant 0 : i32
    %c0_i32_0 = arith.constant 0 : i32
    return %c0_i32, %arg0 : i32, i32
  }
}

</mosaic_0001>

<llo_original>
// kernel: mlp_forward.1
$region0: #{mlp_forward.1}
  #allocation0 [shape = 'u32[]', space=smem, size = 0x4, offset = 0x4, fixed_abs, tag = 'smem constant byte address 0x4 - core index']
  #allocation1 [shape = 'u32[144,128]{1,0:T(1,128)}', space=vmem, size = 0x12000, scoped, tag = 'internal scratch']
  %s0 = inlined_call_operand.vmem [shape: bf16[8,128], index: 0, kind: input, shape index: {}]
  %s1 = inlined_call_operand.vmem [shape: bf16[128,128], index: 1, kind: input, shape index: {}]
  %s2 = inlined_call_operand.vmem [shape: f32[2,128], index: 2, kind: input, shape index: {}]
  %s3 = inlined_call_operand.hbm [shape: f32[8,128], index: 3, kind: output, shape index: {}]
  %s4 = sld [smem:[#allocation0]]
  $region22: #{mlp_forward.1} parent=0
    _
  %s6 = ssub.s32 1, %s4
  %s7 = scalar_select 0, %s6, %s4
  $region1: #{mlp_forward.1} parent=0
    #allocation2 [shape = 'u8[4096]{0}', space=vmem, size = 0x1000, scoped, tag = 'output window, operand 0, single buffered']
    #allocation3 [shape = 's32[1]{0}', space=sflag, size = 0x4, scoped, tag = 'scoped memory for mlp_forward.1']
    %8 = vsyncpa [#allocation3], 0
    // Predicated region
    $region2: #{mlp_forward.1} parent=1 // pred_check
      _
    $region3: #{mlp_forward.1} parent=1 // pred_check_branch
      %10 = sbr.rel (0) target = $region5
    $region4: #{mlp_forward.1} parent=1 // pred_region
      _
    $region5: #{mlp_forward.1} parent=1 // pred_fallthru
      _
    // Predicated region
    $region6: #{mlp_forward.1} parent=1 // pred_check
      _
    $region7: #{mlp_forward.1} parent=1 // pred_check_branch
      %12 = sbr.rel (0) target = $region9
    $region8: #{mlp_forward.1} parent=1 // pred_region
      _
    $region9: #{mlp_forward.1} parent=1 // pred_fallthru
      _
    // Predicated region
    $region10: #{mlp_forward.1} parent=1 // pred_check
      _
    $region11: #{mlp_forward.1} parent=1 // pred_check_branch
      %14 = sbr.rel (0) target = $region13
    $region12: #{mlp_forward.1} parent=1 // pred_region
      _
    $region13: #{mlp_forward.1} parent=1 // pred_fallthru
      _
    %v16 = vld [vmem:[%s0] sm:$0xf]
    %v17 = vld [vmem:[%s1] sm:$0xf]
    %v18 = vld [vmem:[%s1 + $0x4] sm:$0xf]
    %v19 = vld [vmem:[%s1 + $0x8] sm:$0xf]
    %v20 = vld [vmem:[%s1 + $0xc] sm:$0xf]
    %v21 = vld [vmem:[%s1 + $0x10] sm:$0xf]
    %v22 = vld [vmem:[%s1 + $0x14] sm:$0xf]
    %v23 = vld [vmem:[%s1 + $0x18] sm:$0xf]
    %v24 = vld [vmem:[%s1 + $0x1c] sm:$0xf]
    %v25 = vld [vmem:[%s1 + $0x20] sm:$0xf]
    %v26 = vld [vmem:[%s1 + $0x24] sm:$0xf]
    %v27 = vld [vmem:[%s1 + $0x28] sm:$0xf]
    %v28 = vld [vmem:[%s1 + $0x2c] sm:$0xf]
    %v29 = vld [vmem:[%s1 + $0x30] sm:$0xf]
    %v30 = vld [vmem:[%s1 + $0x34] sm:$0xf]
    %v31 = vld [vmem:[%s1 + $0x38] sm:$0xf]
    %v32 = vld [vmem:[%s1 + $0x3c] sm:$0xf]
    %v49 = vunpack.c.l.b16 %v17
    %v50 = vunpack.c.l.b16 %v18
    %v51 = vunpack.c.l.b16 %v19
    %v52 = vunpack.c.l.b16 %v20
    %v53 = vunpack.c.l.b16 %v21
    %v54 = vunpack.c.l.b16 %v22
    %v55 = vunpack.c.l.b16 %v23
    %v56 = vunpack.c.l.b16 %v24
    %v57 = vunpack.c.l.b16 %v25
    %v58 = vunpack.c.l.b16 %v26
    %v59 = vunpack.c.l.b16 %v27
    %v60 = vunpack.c.l.b16 %v28
    %v61 = vunpack.c.l.b16 %v29
    %v62 = vunpack.c.l.b16 %v30
    %v63 = vunpack.c.l.b16 %v31
    %v64 = vunpack.c.l.b16 %v32
    %v65 = vpack.c.b16 %v50, %v49
    %v66 = vpack.c.b16 %v52, %v51
    %v67 = vpack.c.b16 %v54, %v53
    %v68 = vpack.c.b16 %v56, %v55
    %v69 = vpack.c.b16 %v58, %v57
    %v70 = vpack.c.b16 %v60, %v59
    %v71 = vpack.c.b16 %v62, %v61
    %v72 = vpack.c.b16 %v64, %v63
    %81 = vmatprep.subr.bf16.mxu0 0
    %82 = vmatpush1.bf16.msra.mxu0 %v65
    %83 = vmatprep.subr.bf16.mxu0 0
    %84 = vmatpush1.bf16.msra.mxu0 %v66
    %85 = vmatprep.subr.bf16.mxu0 0
    %86 = vmatpush1.bf16.msra.mxu0 %v67
    %87 = vmatprep.subr.bf16.mxu0 0
    %88 = vmatpush1.bf16.msra.mxu0 %v68
    %89 = vmatprep.subr.bf16.mxu0 0
    %90 = vmatpush1.bf16.msra.mxu0 %v69
    %91 = vmatprep.subr.bf16.mxu0 0
    %92 = vmatpush1.bf16.msra.mxu0 %v70
    %93 = vmatprep.subr.bf16.mxu0 0
    %94 = vmatpush1.bf16.msra.mxu0 %v71
    %95 = vmatprep.subr.bf16.mxu0 0
    %96 = vmatpush1.bf16.msra.mxu0 %v72
    %97 = vmatprep.subr.bf16.mxu0 0
    %98 = vmatpush1.bf16.msra.mxu0 0
    %99 = vmatprep.subr.bf16.mxu0 0
    %100 = vmatpush1.bf16.msra.mxu0 0
    %101 = vmatprep.subr.bf16.mxu0 0
    %102 = vmatpush1.bf16.msra.mxu0 0
    %103 = vmatprep.subr.bf16.mxu0 0
    %104 = vmatpush1.bf16.msra.mxu0 0
    %105 = vmatprep.subr.bf16.mxu0 0
    %106 = vmatpush1.bf16.msra.mxu0 0
    %107 = vmatprep.subr.bf16.mxu0 0
    %108 = vmatpush1.bf16.msra.mxu0 0
    %109 = vmatprep.subr.bf16.mxu0 0
    %110 = vmatpush1.bf16.msra.mxu0 0
    %111 = vmatprep.subr.bf16.mxu0 0
    %112 = vmatpush1.bf16.msra.mxu0 0
    %113 = vmatprep.mubr.bf16.mxu0 0
    %114 = vmatmul.mubr.bf16.gmra.mrb[0].mxu0 %v16
    %v115 = vpop.f32.mrb[0].mxu0
    %v116 = vadd.f32 0.0, %v115
    %v117 = vpop.f32.mrb[0].mxu0
    %v118 = vpop.f32.mrb[0].mxu0
    %v119 = vpop.f32.mrb[0].mxu0
    %120 = vdwg.mxu0
    %v121 = vrot.slane %v116, 4
    %v122 = vadd.f32 %v116, %v121
    %v123 = vrot.slane %v122, 2
    %v124 = vadd.f32 %v122, %v123
    %v125 = vrot.slane %v124, 1
    %v126 = vadd.f32 %v124, %v125
    %v127 = vrcp.pop 8.0
    %v128 = vmul.f32 %v126, %v127
    %v129 = vsub.f32 %v116, %v128
    %v130 = vmul.f32 %v129, %v129
    %v131 = vrot.slane %v130, 4
    %v132 = vadd.f32 %v130, %v131
    %v133 = vrot.slane %v132, 2
    %v134 = vadd.f32 %v132, %v133
    %v135 = vrot.slane %v134, 1
    %v136 = vadd.f32 %v134, %v135
    %v137 = vmul.f32 %v136, %v127
    %v138 = vld [vmem:[%s2] sm:$0x1]
    %v139 = vld [vmem:[%s2 + $0x1] sm:$0x1]
    %v140 = vadd.f32 %v137, 1e-05
    %v141 = vrsqrt.pop %v140
    %v142 = vmul.f32 %v138, %v141
    %v143 = vmul.f32 %v128, %v142
    %v144 = vsub.f32 %v139, %v143
    %v145 = vlaneseq
    %v146 = vshrl.u32 %v145, 7
    %v147 = vsub.s32 0, %v146
    %v148 = vrot.slane %v142, %v147
    %v149 = vmul.f32 %v116, %v148
    %v150 = vlaneseq
    %v151 = vshrl.u32 %v150, 7
    %v152 = vsub.s32 0, %v151
    %v153 = vrot.slane %v144, %v152
    %v154 = vadd.f32 %v149, %v153
    %v155 = vmax.f32 %v154, 0.0
    %156 = vst [vmem:[#allocation2] sm:$0xff] %v155
    // Predicated region
    $region14: #{mlp_forward.1} parent=1 // pred_check
      _
    $region15: #{mlp_forward.1} parent=1 // pred_check_branch
      %158 = sbr.rel (0) target = $region17
    $region16: #{mlp_forward.1} parent=1 // pred_region
      %s160 = ssub.s32 128, 128
      %161 = vsyncadd [#allocation3], %s160
      %s163 = sshll.u32 [#allocation2], 4
      %s164 = int_to_ptr.vmem [resolvable:$true] %s163
      %166 = dma.vmem_to_hbm [thread:$0]  %s164, 128, %s3, [#allocation3]
    $region17: #{mlp_forward.1} parent=1 // pred_fallthru
      _
    // Predicated region
    $region18: #{mlp_forward.1} parent=1 // pred_check
      _
    $region19: #{mlp_forward.1} parent=1 // pred_check_branch
      %168 = sbr.rel (0) target = $region21
    $region20: #{mlp_forward.1} parent=1 // pred_region
      %169 = dma.done [#allocation3], 128
    $region21: #{mlp_forward.1} parent=1 // pred_fallthru
      _
    %170 = vsyncpa [#allocation3], 1

</llo_original>
